<compile_context>
chip_gen: v7x
topology: tpu7x:2x2x1
jax: 0.10.0
libtpu: 0.0.40
codegen_flags: <defaults>
</compile_context>

<pallas_src>
import jax
import jax.numpy as jnp
from jax.experimental import pallas as pl
from jax.experimental.pallas import tpu as pltpu

_MIN_LANES = 128
_TARGET_BLOCK_BYTES = 1 << 20   # ~1 MiB per pipelined VMEM window


def etf_loss_kernel(label_ref, output_ref, loss_ref):
    label = label_ref[...]
    diff = jnp.abs(label - output_ref[...])
    # (label - |label - output|) / label, elementwise. HBM-bound: use the exact divide.
    loss_ref[...] = (label - diff) / label
    # TODO(synk): original `loss = torch.add(part1, 1, part2)` references an undefined
    # `part2` (NameError in the PyTorch source) and is omitted; the dead `weights`
    # tensor in the original forward is never materialized.


def _round_up(x, m):
    return -(-x // m) * m


@jax.jit
def etf_loss(label, output, data=None):
    """ETFLoss.forward. `data` is accepted for interface parity with the PyTorch module
    but is dead code in the original forward, so it is never DMA'd into the kernel."""
    del data  # unused by the original module's math
    assert label.shape == output.shape
    orig_shape = label.shape
    dtype = label.dtype
    itemsize = jnp.dtype(dtype).itemsize
    assert itemsize in (1, 2, 4), "unsupported dtype for TPU tiling"
    sub = 8 * (4 // itemsize)          # min sublane multiple: 8 (f32), 16 (bf16), 32 (i8)
    total = label.size

    # --- choose layout -------------------------------------------------------------
    lanes = None
    for cand in (1024, 512, 256, _MIN_LANES):
        if total % (sub * cand) == 0:
            lanes = cand
            break

    if lanes is not None:
        # Fast path: contiguous reshape only -- zero extra HBM copies.
        rows = total // lanes
        label_2d = label.reshape(rows, lanes)
        output_2d = output.reshape(rows, lanes)
        padded = False
    else:
        # Slow path: pad only up to (sub, 128) granularity.
        lanes = _MIN_LANES
        padded_total = _round_up(total, sub * lanes)
        rows = padded_total // lanes

        def to_slab(x):
            flat = jnp.pad(x.reshape(-1), (0, padded_total - total),
                           constant_values=1)  # 1 keeps the divide finite in pad lanes
            return flat.reshape(rows, lanes)

        label_2d = to_slab(label)
        output_2d = to_slab(output)
        padded = True

    # --- choose block size ---------------------------------------------------------
    target_rows = max(sub, ((_TARGET_BLOCK_BYTES // (lanes * itemsize)) // sub) * sub)
    block_rows = min(target_rows, rows)
    # v7x megacore: keep at least 2 grid iterations so both TensorCores get work.
    if block_rows >= rows and rows >= 2 * sub:
        block_rows = _round_up(-(-rows // 2), sub)
    grid = (pl.cdiv(rows, block_rows),)

    spec = pl.BlockSpec((block_rows, lanes), lambda i: (i, 0))
    n_elems = rows * lanes
    out = pl.pallas_call(
        etf_loss_kernel,
        out_shape=jax.ShapeDtypeStruct((rows, lanes), dtype),
        grid=grid,
        in_specs=[spec, spec],
        out_specs=spec,
        cost_estimate=pl.CostEstimate(
            flops=4 * n_elems,
            transcendentals=0,
            bytes_accessed=3 * n_elems * itemsize),
        compiler_params=pltpu.CompilerParams(
            dimension_semantics=("parallel",)),
    )(label_2d, output_2d)

    if padded:
        return out.reshape(-1)[:total].reshape(orig_shape)
    return out.reshape(orig_shape)


if __name__ == "__main__":
    key = jax.random.PRNGKey(0)

    # Small shape consistent with the module: batch of 8 ETFs, 5 days of close prices.
    k1, k2, k3 = jax.random.split(key, 3)
    B, D = 8, 5
    # close prices kept strictly positive so the division is well defined
    label = jax.random.uniform(k1, (B, D), jnp.float32, minval=1.0, maxval=2.0)
    output = jax.random.uniform(k2, (B, D), jnp.float32, minval=1.0, maxval=2.0)
    data = jax.random.uniform(k3, (B, D), jnp.float32, minval=1.0, maxval=2.0)

    loss = etf_loss(label, output, data)
    jax.block_until_ready(loss)
    ref = (label - jnp.abs(label - output)) / label
    assert loss.shape == label.shape
    assert jnp.allclose(loss, ref, atol=1e-5, rtol=1e-5)

    # Larger shape exercising the no-pad fast path (wide lanes, multi-block grid).
    k4, k5 = jax.random.split(k3)
    label2 = jax.random.uniform(k4, (64, 2048), jnp.float32, minval=1.0, maxval=2.0)
    output2 = jax.random.uniform(k5, (64, 2048), jnp.float32, minval=1.0, maxval=2.0)
    loss2 = etf_loss(label2, output2)
    jax.block_until_ready(loss2)
    ref2 = (label2 - jnp.abs(label2 - output2)) / label2
    assert loss2.shape == label2.shape
    assert jnp.allclose(loss2, ref2, atol=1e-5, rtol=1e-5)

    print("KERNEL_OK")
</pallas_src>

<mosaic_0001>
module attributes {stable_mosaic.version = 11 : i64} {
  func.func @etf_loss_kernel(%arg0: i32, %arg1: memref<8x128xf32, #tpu.memory_space<vmem>>, %arg2: memref<8x128xf32, #tpu.memory_space<vmem>>, %arg3: memref<8x128xf32, #tpu.memory_space<vmem>>) attributes {dimension_semantics = [#tpu.dimension_semantics<parallel>], iteration_bounds = array<i64: 1>, scalar_prefetch = 0 : i64, scratch_operands = 0 : i64, tpu.core_type = #tpu.core_type<tc>, window_params = [{transform_indices = @transform_0, window_bounds = array<i64: 8, 128>}, {transform_indices = @transform_1, window_bounds = array<i64: 8, 128>}, {transform_indices = @transform_2, window_bounds = array<i64: 8, 128>}]} {
    %c0 = arith.constant 0 : index
    %c0_0 = arith.constant 0 : index
    %0 = vector.load %arg1[%c0, %c0_0] : memref<8x128xf32, #tpu.memory_space<vmem>>, vector<8x128xf32>
    %c0_1 = arith.constant 0 : index
    %c0_2 = arith.constant 0 : index
    %1 = vector.load %arg2[%c0_1, %c0_2] : memref<8x128xf32, #tpu.memory_space<vmem>>, vector<8x128xf32>
    %2 = arith.subf %0, %1 : vector<8x128xf32>
    %3 = math.absf %2 : vector<8x128xf32>
    %4 = arith.subf %0, %3 : vector<8x128xf32>
    %5 = arith.divf %4, %0 : vector<8x128xf32>
    %c0_3 = arith.constant 0 : index
    %c0_4 = arith.constant 0 : index
    %6 = vector.load %arg3[%c0_3, %c0_4] : memref<8x128xf32, #tpu.memory_space<vmem>>, vector<8x128xf32>
    tpu.vector_store %arg3[%c0_3, %c0_4], %5 {strides = array<i32>} : memref<8x128xf32, #tpu.memory_space<vmem>>, vector<8x128xf32>,
    return
  }
  func.func @transform_0(%arg0: i32) -> (i32, i32) {
    %c0_i32 = arith.constant 0 : i32
    %c0_i32_0 = arith.constant 0 : i32
    return %arg0, %c0_i32 : i32, i32
  }
  func.func @transform_1(%arg0: i32) -> (i32, i32) {
    %c0_i32 = arith.constant 0 : i32
    %c0_i32_0 = arith.constant 0 : i32
    return %arg0, %c0_i32 : i32, i32
  }
  func.func @transform_2(%arg0: i32) -> (i32, i32) {
    %c0_i32 = arith.constant 0 : i32
    %c0_i32_0 = arith.constant 0 : i32
    return %arg0, %c0_i32 : i32, i32
  }
}

</mosaic_0001>

<llo_original>
// kernel: etf_loss.1
$region0: #{etf_loss.1}
  #allocation0 [shape = 'u32[]', space=smem, size = 0x4, offset = 0x4, fixed_abs, tag = 'smem constant byte address 0x4 - core index']
  #allocation1 [shape = 'u32[144,128]{1,0:T(1,128)}', space=vmem, size = 0x12000, scoped, tag = 'internal scratch']
  %s0 = inlined_call_operand.vmem [shape: f32[8,128], index: 0, kind: input, shape index: {}]
  %s1 = inlined_call_operand.vmem [shape: f32[8,128], index: 1, kind: input, shape index: {}]
  %s2 = inlined_call_operand.vmem [shape: f32[8,128], index: 2, kind: output, shape index: {}]
  %s3 = sld [smem:[#allocation0]]
  $region18: #{etf_loss.1} parent=0
    _
  %s5 = ssub.s32 1, %s3
  %s6 = scalar_select 0, %s5, %s3
  // Predicated region
  $region2: #{etf_loss.1} parent=0 // pred_check
    _
  $region3: #{etf_loss.1} parent=0 // pred_check_branch
    %8 = sbr.rel (0) target = $region5
  $region4: #{etf_loss.1} parent=0 // pred_region
    _
  $region5: #{etf_loss.1} parent=0 // pred_fallthru
    _
  // Predicated region
  $region6: #{etf_loss.1} parent=0 // pred_check
    _
  $region7: #{etf_loss.1} parent=0 // pred_check_branch
    %10 = sbr.rel (0) target = $region9
  $region8: #{etf_loss.1} parent=0 // pred_region
    _
  $region9: #{etf_loss.1} parent=0 // pred_fallthru
    _
  %v11 = vld [vmem:[%s0] sm:$0xff]
  %v12 = vld [vmem:[%s1] sm:$0xff]
  %v13 = vsub.f32 %v11, %v12
  %v14 = vand.u32 2147483647, %v13
  %v15 = vsub.f32 %v11, %v14
  %v16 = vrcp.pop %v11
  %v17 = vmul.f32 %v15, %v16
  %18 = vst [vmem:[%s2] sm:$0xff] %v17
  // Predicated region
  $region10: #{etf_loss.1} parent=0 // pred_check
    _
  $region11: #{etf_loss.1} parent=0 // pred_check_branch
    %20 = sbr.rel (0) target = $region13
  $region12: #{etf_loss.1} parent=0 // pred_region
    _
  $region13: #{etf_loss.1} parent=0 // pred_fallthru
    _
  // Predicated region
  $region14: #{etf_loss.1} parent=0 // pred_check
    _
  $region15: #{etf_loss.1} parent=0 // pred_check_branch
    %22 = sbr.rel (0) target = $region17
  $region16: #{etf_loss.1} parent=0 // pred_region
    _
  $region17: #{etf_loss.1} parent=0 // pred_fallthru
    _

</llo_original>
